<compile_context>
chip_gen: v5e
topology: v5e:2x2
jax: 0.10.0
libtpu: 0.0.40
codegen_flags: <defaults>
</compile_context>

<pallas_src>
import functools

import jax
import jax.numpy as jnp
from jax.experimental import pallas as pl
from jax.experimental.pallas import tpu as pltpu


def _residual_block_kernel(x_ref, w_ref, mask_ref, out_ref, *, H, W):
    # x_ref:    (1, C, H*W)  one sample, NCHW with (H, W) flattened, f32
    # w_ref:    (9, C, C)    conv weights per tap, [tap, cout, cin], matmul dtype
    # mask_ref: (9, H*W)     {0,1} boundary masks per tap, matmul dtype
    # out_ref:  (1, C, H*W)
    HW = H * W
    x = x_ref[0]                                   # (C, HW) f32
    mm_dtype = w_ref.dtype

    # 3x3 conv (padding=1) as 9 accumulating MXU matmuls — no im2col scratch.
    # Per tap: lane-roll the flattened sample (XLU), fuse cast-to-matmul-dtype
    # with the {0,1} boundary mask multiply (realizes the zero padding), and
    # feed the MXU directly; accumulate in f32.
    acc = None
    for kh in range(3):
        for kw in range(3):
            tap = kh * 3 + kw
            dh, dw = kh - 1, kw - 1
            d = dh * W + dw                        # flat-index shift
            if d == 0:
                piece = x.astype(mm_dtype)         # center tap: mask is all ones
            else:
                shifted = pltpu.roll(x, (-d) % HW, axis=1)
                piece = shifted.astype(mm_dtype) * mask_ref[tap:tap + 1, :]
            contrib = jnp.dot(w_ref[tap], piece,
                              preferred_element_type=jnp.float32)   # (C, HW)
            acc = contrib if acc is None else acc + contrib

    # InstanceNorm2d (affine=False, eps=1e-5): per-channel biased stats over
    # H*W.  Two-pass centered variance (cancellation-safe).  The conv bias is
    # skipped — it is exactly cancelled by the mean subtraction.
    inv_hw = 1.0 / HW
    mean = jnp.sum(acc, axis=1, keepdims=True) * inv_hw              # (C, 1)
    centered = acc - mean
    var = jnp.sum(centered * centered, axis=1, keepdims=True) * inv_hw
    norm = centered * jax.lax.rsqrt(var + 1e-5)

    # Residual add + ReLU.  (conv_block1 of the reference module is dead code —
    # its output is overwritten by conv_block2(x) — so it is not computed.)
    out_ref[0] = jnp.maximum(x + norm, 0.0).astype(out_ref.dtype)


def residual_block_forward(x_nchw, w2_oihw, b2=None, *,
                           matmul_dtype=jnp.bfloat16):
    """x_nchw: (N, C, H, W) float32.  Returns (N, C, H, W) float32.

    b2 is accepted for API parity with the PyTorch module but unused: with
    InstanceNorm2d(affine=False) the bias is exactly cancelled by the
    per-channel mean subtraction.  matmul_dtype=bf16 (f32 accumulation) is the
    production path on v5e/v6e/v7x; f32 is for strict-parity checks only.
    """
    del b2
    N, C, H, W = x_nchw.shape
    HW = H * W
    itemsize = jnp.dtype(matmul_dtype).itemsize

    # NCHW stays NCHW: only a free contiguous reshape in the wrapper.
    x_flat = x_nchw.reshape(N, C, HW)

    # OIHW -> (tap, cout, cin): per-tap (C, C) slabs indexed on the leading
    # axis inside the kernel (no lane-axis weight slicing).
    w_taps = jnp.transpose(w2_oihw, (2, 3, 0, 1)).reshape(9, C, C)
    w_taps = w_taps.astype(matmul_dtype)

    # Precomputed {0,1} boundary masks per tap (tiny constant), stored in the
    # matmul dtype so the in-kernel cast+mask is one packed bf16 VPU pass on
    # v6e/v7x.  (v5e has no bf16 VALU; still correct, just runs widened.)
    row = jnp.arange(H, dtype=jnp.int32).reshape(H, 1)
    col = jnp.arange(W, dtype=jnp.int32).reshape(1, W)
    masks = []
    for kh in range(3):
        for kw in range(3):
            dh, dw = kh - 1, kw - 1
            m = ((row + dh >= 0) & (row + dh < H) &
                 (col + dw >= 0) & (col + dw < W))
            masks.append(m.reshape(HW))
    mask_arr = jnp.stack(masks, axis=0).astype(matmul_dtype)         # (9, HW)

    # Right-size the scoped-VMEM limit from the actual per-step footprint
    # (double-buffered blocks + an allowance for compiler temporaries) instead
    # of hard-coding the whole v7x VMEM.  Floored at the 32 MiB default,
    # capped at 3/4 of physical VMEM for the current generation.
    block_bytes = (2 * C * HW * 4                 # x block, double-buffered
                   + 2 * C * HW * 4               # out block, double-buffered
                   + 2 * 9 * C * C * itemsize     # weights (grid-invariant)
                   + 2 * 9 * HW * itemsize)       # masks   (grid-invariant)
    temp_bytes = (4 * C * HW * 4                  # acc/centered/norm/out f32
                  + 3 * C * HW * itemsize)        # per-tap shifted/piece temps
    try:
        phys_vmem = pltpu.get_tpu_info().vmem_capacity_bytes
    except Exception:
        phys_vmem = 128 * 1024 * 1024             # conservative v5e/v6e default
    vmem_limit = max(32 * 1024 * 1024,
                     min(int(1.25 * (block_bytes + temp_bytes)),
                         (3 * phys_vmem) // 4))

    kernel = functools.partial(_residual_block_kernel, H=H, W=W)

    # Grid: one sample per step, "parallel" so batches shard across v7x's two
    # TensorCores.  Weight/mask index_maps are constant, so their blocks are
    # not re-fetched across grid steps.
    # TODO(synk): for N=1 inference on v7x, add a second parallel grid axis
    # over output channels (InstanceNorm is per-channel, so a cout split is
    # clean) so both TensorCores get work; and for tiny images (HW << 1024),
    # lane-pack several samples per grid step to amortize the ~0.35 us
    # per-step overhead and restore a lane-dense MXU N.
    out_flat = pl.pallas_call(
        kernel,
        out_shape=jax.ShapeDtypeStruct((N, C, HW), x_nchw.dtype),
        grid_spec=pltpu.PrefetchScalarGridSpec(
            num_scalar_prefetch=0,
            grid=(N,),
            in_specs=[
                pl.BlockSpec((1, C, HW), lambda n: (n, 0, 0)),
                pl.BlockSpec((9, C, C), lambda n: (0, 0, 0)),
                pl.BlockSpec((9, HW), lambda n: (0, 0)),
            ],
            out_specs=pl.BlockSpec((1, C, HW), lambda n: (n, 0, 0)),
        ),
        compiler_params=pltpu.CompilerParams(
            dimension_semantics=("parallel",),
            vmem_limit_bytes=vmem_limit,
        ),
    )(x_flat, w_taps, mask_arr)

    return out_flat.reshape(N, C, H, W)


def _reference_forward(x_nchw, w2_oihw, b2):
    """Pure-JAX reference (matches the PyTorch forward, bias included)."""
    conv = jax.lax.conv_general_dilated(
        x_nchw, w2_oihw, window_strides=(1, 1), padding=((1, 1), (1, 1)),
        dimension_numbers=("NCHW", "OIHW", "NCHW"),
    ) + b2.reshape(1, -1, 1, 1)
    mean = jnp.mean(conv, axis=(2, 3), keepdims=True)
    var = jnp.mean((conv - mean) ** 2, axis=(2, 3), keepdims=True)
    norm = (conv - mean) / jnp.sqrt(var + 1e-5)
    return jnp.maximum(x_nchw + norm, 0.0)


if __name__ == "__main__":
    key = jax.random.PRNGKey(0)
    N, C, H, W = 2, 4, 16, 16
    k_x, k_w1, k_b1, k_w2, k_b2 = jax.random.split(key, 5)

    x = jax.random.normal(k_x, (N, C, H, W), dtype=jnp.float32)

    # ConvBlock params (Conv2d(C, C, 3, padding=1)).  conv_block1's params are
    # created as in __init__, but its output is discarded by forward().
    w1 = jax.random.normal(k_w1, (C, C, 3, 3), dtype=jnp.float32) * 0.1
    b1 = jax.random.normal(k_b1, (C,), dtype=jnp.float32) * 0.1
    w2 = jax.random.normal(k_w2, (C, C, 3, 3), dtype=jnp.float32) * 0.1
    b2 = jax.random.normal(k_b2, (C,), dtype=jnp.float32) * 0.1
    del w1, b1  # dead branch in the reference forward

    ref = _reference_forward(x, w2, b2)

    # f32 matmul path: tight check against the pure-JAX reference.
    out_f32 = jax.block_until_ready(
        residual_block_forward(x, w2, b2, matmul_dtype=jnp.float32))
    if not jnp.allclose(out_f32, ref, atol=1e-3, rtol=1e-3):
        raise AssertionError("Pallas kernel (f32 matmul) does not match reference")

    # bf16 matmul path (production default), f32 accumulation.
    out_bf16 = jax.block_until_ready(residual_block_forward(x, w2, b2))
    if not jnp.allclose(out_bf16, ref, atol=3e-2, rtol=3e-2):
        raise AssertionError("Pallas kernel (bf16 matmul) does not match reference")

    print("KERNEL_OK")
</pallas_src>

<mosaic_0001>
module attributes {stable_mosaic.version = 11 : i64} {
  func.func @_residual_block_kernel(%arg0: i32, %arg1: memref<1x4x256xf32, #tpu.memory_space<vmem>>, %arg2: memref<9x4x4xf32, #tpu.memory_space<vmem>>, %arg3: memref<9x256xf32, #tpu.memory_space<vmem>>, %arg4: memref<1x4x256xf32, #tpu.memory_space<vmem>>) attributes {dimension_semantics = [#tpu.dimension_semantics<parallel>], iteration_bounds = array<i64: 2>, scalar_prefetch = 0 : i64, scratch_operands = 0 : i64, tpu.core_type = #tpu.core_type<tc>, window_params = [{transform_indices = @transform_0, window_bounds = array<i64: 1, 4, 256>}, {pipeline_mode = #tpu.pipeline_mode<synchronous>, transform_indices = @transform_1, window_bounds = array<i64: 9, 4, 4>}, {pipeline_mode = #tpu.pipeline_mode<synchronous>, transform_indices = @transform_2, window_bounds = array<i64: 9, 256>}, {transform_indices = @transform_3, window_bounds = array<i64: 1, 4, 256>}]} {
    %c0 = arith.constant 0 : index
    %c0_0 = arith.constant 0 : index
    %c0_1 = arith.constant 0 : index
    %0 = vector.load %arg1[%c0, %c0_0, %c0_1] : memref<1x4x256xf32, #tpu.memory_space<vmem>>, vector<1x4x256xf32>
    %1 = vector.shape_cast %0 : vector<1x4x256xf32> to vector<4x256xf32>
    %c17_i32 = arith.constant 17 : i32
    %2 = tpu.dynamic_rotate %1 by %c17_i32 dim 1 : vector<4x256xf32>, i32 -> vector<4x256xf32>
    %c0_2 = arith.constant 0 : index
    %c0_3 = arith.constant 0 : index
    %3 = vector.load %arg3[%c0_2, %c0_3] : memref<9x256xf32, #tpu.memory_space<vmem>>, vector<1x256xf32>
    %4 = vector.broadcast %3 : vector<1x256xf32> to vector<4x256xf32>
    %5 = arith.mulf %2, %4 : vector<4x256xf32>
    %c0_4 = arith.constant 0 : index
    %c0_5 = arith.constant 0 : index
    %c0_6 = arith.constant 0 : index
    %6 = vector.load %arg2[%c0_4, %c0_5, %c0_6] : memref<9x4x4xf32, #tpu.memory_space<vmem>>, vector<1x4x4xf32>
    %7 = vector.shape_cast %6 : vector<1x4x4xf32> to vector<4x4xf32>
    %cst = arith.constant dense<0.000000e+00> : vector<4x256xf32>
    %8 = tpu.matmul %7, %5, %cst {dimension_numbers = #tpu.dot_dimension_numbers<[1], [0], [0], [1], [0, 0, 1, 1], [], []>} : vector<4x4xf32>, vector<4x256xf32>, vector<4x256xf32> -> vector<4x256xf32>
    %c16_i32 = arith.constant 16 : i32
    %9 = tpu.dynamic_rotate %1 by %c16_i32 dim 1 : vector<4x256xf32>, i32 -> vector<4x256xf32>
    %c1 = arith.constant 1 : index
    %c0_7 = arith.constant 0 : index
    %10 = vector.load %arg3[%c1, %c0_7] : memref<9x256xf32, #tpu.memory_space<vmem>>, vector<1x256xf32>
    %11 = vector.broadcast %10 : vector<1x256xf32> to vector<4x256xf32>
    %12 = arith.mulf %9, %11 : vector<4x256xf32>
    %c1_8 = arith.constant 1 : index
    %c0_9 = arith.constant 0 : index
    %c0_10 = arith.constant 0 : index
    %13 = vector.load %arg2[%c1_8, %c0_9, %c0_10] : memref<9x4x4xf32, #tpu.memory_space<vmem>>, vector<1x4x4xf32>
    %14 = vector.shape_cast %13 : vector<1x4x4xf32> to vector<4x4xf32>
    %cst_11 = arith.constant dense<0.000000e+00> : vector<4x256xf32>
    %15 = tpu.matmul %14, %12, %cst_11 {dimension_numbers = #tpu.dot_dimension_numbers<[1], [0], [0], [1], [0, 0, 1, 1], [], []>} : vector<4x4xf32>, vector<4x256xf32>, vector<4x256xf32> -> vector<4x256xf32>
    %16 = arith.addf %8, %15 : vector<4x256xf32>
    %c15_i32 = arith.constant 15 : i32
    %17 = tpu.dynamic_rotate %1 by %c15_i32 dim 1 : vector<4x256xf32>, i32 -> vector<4x256xf32>
    %c2 = arith.constant 2 : index
    %c0_12 = arith.constant 0 : index
    %18 = vector.load %arg3[%c2, %c0_12] : memref<9x256xf32, #tpu.memory_space<vmem>>, vector<1x256xf32>
    %19 = vector.broadcast %18 : vector<1x256xf32> to vector<4x256xf32>
    %20 = arith.mulf %17, %19 : vector<4x256xf32>
    %c2_13 = arith.constant 2 : index
    %c0_14 = arith.constant 0 : index
    %c0_15 = arith.constant 0 : index
    %21 = vector.load %arg2[%c2_13, %c0_14, %c0_15] : memref<9x4x4xf32, #tpu.memory_space<vmem>>, vector<1x4x4xf32>
    %22 = vector.shape_cast %21 : vector<1x4x4xf32> to vector<4x4xf32>
    %cst_16 = arith.constant dense<0.000000e+00> : vector<4x256xf32>
    %23 = tpu.matmul %22, %20, %cst_16 {dimension_numbers = #tpu.dot_dimension_numbers<[1], [0], [0], [1], [0, 0, 1, 1], [], []>} : vector<4x4xf32>, vector<4x256xf32>, vector<4x256xf32> -> vector<4x256xf32>
    %24 = arith.addf %16, %23 : vector<4x256xf32>
    %c1_i32 = arith.constant 1 : i32
    %25 = tpu.dynamic_rotate %1 by %c1_i32 dim 1 : vector<4x256xf32>, i32 -> vector<4x256xf32>
    %c3 = arith.constant 3 : index
    %c0_17 = arith.constant 0 : index
    %26 = vector.load %arg3[%c3, %c0_17] : memref<9x256xf32, #tpu.memory_space<vmem>>, vector<1x256xf32>
    %27 = vector.broadcast %26 : vector<1x256xf32> to vector<4x256xf32>
    %28 = arith.mulf %25, %27 : vector<4x256xf32>
    %c3_18 = arith.constant 3 : index
    %c0_19 = arith.constant 0 : index
    %c0_20 = arith.constant 0 : index
    %29 = vector.load %arg2[%c3_18, %c0_19, %c0_20] : memref<9x4x4xf32, #tpu.memory_space<vmem>>, vector<1x4x4xf32>
    %30 = vector.shape_cast %29 : vector<1x4x4xf32> to vector<4x4xf32>
    %cst_21 = arith.constant dense<0.000000e+00> : vector<4x256xf32>
    %31 = tpu.matmul %30, %28, %cst_21 {dimension_numbers = #tpu.dot_dimension_numbers<[1], [0], [0], [1], [0, 0, 1, 1], [], []>} : vector<4x4xf32>, vector<4x256xf32>, vector<4x256xf32> -> vector<4x256xf32>
    %32 = arith.addf %24, %31 : vector<4x256xf32>
    %c4 = arith.constant 4 : index
    %c0_22 = arith.constant 0 : index
    %c0_23 = arith.constant 0 : index
    %33 = vector.load %arg2[%c4, %c0_22, %c0_23] : memref<9x4x4xf32, #tpu.memory_space<vmem>>, vector<1x4x4xf32>
    %34 = vector.shape_cast %33 : vector<1x4x4xf32> to vector<4x4xf32>
    %cst_24 = arith.constant dense<0.000000e+00> : vector<4x256xf32>
    %35 = tpu.matmul %34, %1, %cst_24 {dimension_numbers = #tpu.dot_dimension_numbers<[1], [0], [0], [1], [0, 0, 1, 1], [], []>} : vector<4x4xf32>, vector<4x256xf32>, vector<4x256xf32> -> vector<4x256xf32>
    %36 = arith.addf %32, %35 : vector<4x256xf32>
    %c255_i32 = arith.constant 255 : i32
    %37 = tpu.dynamic_rotate %1 by %c255_i32 dim 1 : vector<4x256xf32>, i32 -> vector<4x256xf32>
    %c5 = arith.constant 5 : index
    %c0_25 = arith.constant 0 : index
    %38 = vector.load %arg3[%c5, %c0_25] : memref<9x256xf32, #tpu.memory_space<vmem>>, vector<1x256xf32>
    %39 = vector.broadcast %38 : vector<1x256xf32> to vector<4x256xf32>
    %40 = arith.mulf %37, %39 : vector<4x256xf32>
    %c5_26 = arith.constant 5 : index
    %c0_27 = arith.constant 0 : index
    %c0_28 = arith.constant 0 : index
    %41 = vector.load %arg2[%c5_26, %c0_27, %c0_28] : memref<9x4x4xf32, #tpu.memory_space<vmem>>, vector<1x4x4xf32>
    %42 = vector.shape_cast %41 : vector<1x4x4xf32> to vector<4x4xf32>
    %cst_29 = arith.constant dense<0.000000e+00> : vector<4x256xf32>
    %43 = tpu.matmul %42, %40, %cst_29 {dimension_numbers = #tpu.dot_dimension_numbers<[1], [0], [0], [1], [0, 0, 1, 1], [], []>} : vector<4x4xf32>, vector<4x256xf32>, vector<4x256xf32> -> vector<4x256xf32>
    %44 = arith.addf %36, %43 : vector<4x256xf32>
    %c241_i32 = arith.constant 241 : i32
    %45 = tpu.dynamic_rotate %1 by %c241_i32 dim 1 : vector<4x256xf32>, i32 -> vector<4x256xf32>
    %c6 = arith.constant 6 : index
    %c0_30 = arith.constant 0 : index
    %46 = vector.load %arg3[%c6, %c0_30] : memref<9x256xf32, #tpu.memory_space<vmem>>, vector<1x256xf32>
    %47 = vector.broadcast %46 : vector<1x256xf32> to vector<4x256xf32>
    %48 = arith.mulf %45, %47 : vector<4x256xf32>
    %c6_31 = arith.constant 6 : index
    %c0_32 = arith.constant 0 : index
    %c0_33 = arith.constant 0 : index
    %49 = vector.load %arg2[%c6_31, %c0_32, %c0_33] : memref<9x4x4xf32, #tpu.memory_space<vmem>>, vector<1x4x4xf32>
    %50 = vector.shape_cast %49 : vector<1x4x4xf32> to vector<4x4xf32>
    %cst_34 = arith.constant dense<0.000000e+00> : vector<4x256xf32>
    %51 = tpu.matmul %50, %48, %cst_34 {dimension_numbers = #tpu.dot_dimension_numbers<[1], [0], [0], [1], [0, 0, 1, 1], [], []>} : vector<4x4xf32>, vector<4x256xf32>, vector<4x256xf32> -> vector<4x256xf32>
    %52 = arith.addf %44, %51 : vector<4x256xf32>
    %c240_i32 = arith.constant 240 : i32
    %53 = tpu.dynamic_rotate %1 by %c240_i32 dim 1 : vector<4x256xf32>, i32 -> vector<4x256xf32>
    %c7 = arith.constant 7 : index
    %c0_35 = arith.constant 0 : index
    %54 = vector.load %arg3[%c7, %c0_35] : memref<9x256xf32, #tpu.memory_space<vmem>>, vector<1x256xf32>
    %55 = vector.broadcast %54 : vector<1x256xf32> to vector<4x256xf32>
    %56 = arith.mulf %53, %55 : vector<4x256xf32>
    %c7_36 = arith.constant 7 : index
    %c0_37 = arith.constant 0 : index
    %c0_38 = arith.constant 0 : index
    %57 = vector.load %arg2[%c7_36, %c0_37, %c0_38] : memref<9x4x4xf32, #tpu.memory_space<vmem>>, vector<1x4x4xf32>
    %58 = vector.shape_cast %57 : vector<1x4x4xf32> to vector<4x4xf32>
    %cst_39 = arith.constant dense<0.000000e+00> : vector<4x256xf32>
    %59 = tpu.matmul %58, %56, %cst_39 {dimension_numbers = #tpu.dot_dimension_numbers<[1], [0], [0], [1], [0, 0, 1, 1], [], []>} : vector<4x4xf32>, vector<4x256xf32>, vector<4x256xf32> -> vector<4x256xf32>
    %60 = arith.addf %52, %59 : vector<4x256xf32>
    %c239_i32 = arith.constant 239 : i32
    %61 = tpu.dynamic_rotate %1 by %c239_i32 dim 1 : vector<4x256xf32>, i32 -> vector<4x256xf32>
    %c8 = arith.constant 8 : index
    %c0_40 = arith.constant 0 : index
    %62 = vector.load %arg3[%c8, %c0_40] : memref<9x256xf32, #tpu.memory_space<vmem>>, vector<1x256xf32>
    %63 = vector.broadcast %62 : vector<1x256xf32> to vector<4x256xf32>
    %64 = arith.mulf %61, %63 : vector<4x256xf32>
    %c8_41 = arith.constant 8 : index
    %c0_42 = arith.constant 0 : index
    %c0_43 = arith.constant 0 : index
    %65 = vector.load %arg2[%c8_41, %c0_42, %c0_43] : memref<9x4x4xf32, #tpu.memory_space<vmem>>, vector<1x4x4xf32>
    %66 = vector.shape_cast %65 : vector<1x4x4xf32> to vector<4x4xf32>
    %cst_44 = arith.constant dense<0.000000e+00> : vector<4x256xf32>
    %67 = tpu.matmul %66, %64, %cst_44 {dimension_numbers = #tpu.dot_dimension_numbers<[1], [0], [0], [1], [0, 0, 1, 1], [], []>} : vector<4x4xf32>, vector<4x256xf32>, vector<4x256xf32> -> vector<4x256xf32>
    %68 = arith.addf %60, %67 : vector<4x256xf32>
    %cst_45 = arith.constant dense<0.000000e+00> : vector<4xf32>
    %69 = vector.multi_reduction <add>, %68, %cst_45 [1] : vector<4x256xf32> to vector<4xf32>
    %70 = vector.shape_cast %69 : vector<4xf32> to vector<4x1xf32>
    %cst_46 = arith.constant 3.906250e-03 : f32
    %71 = vector.broadcast %cst_46 : f32 to vector<4x1xf32>
    %72 = arith.mulf %70, %71 : vector<4x1xf32>
    %73 = vector.broadcast %72 : vector<4x1xf32> to vector<4x256xf32>
    %74 = arith.subf %68, %73 : vector<4x256xf32>
    %75 = arith.mulf %74, %74 : vector<4x256xf32>
    %cst_47 = arith.constant dense<0.000000e+00> : vector<4xf32>
    %76 = vector.multi_reduction <add>, %75, %cst_47 [1] : vector<4x256xf32> to vector<4xf32>
    %77 = vector.shape_cast %76 : vector<4xf32> to vector<4x1xf32>
    %cst_48 = arith.constant 3.906250e-03 : f32
    %78 = vector.broadcast %cst_48 : f32 to vector<4x1xf32>
    %79 = arith.mulf %77, %78 : vector<4x1xf32>
    %cst_49 = arith.constant 9.99999974E-6 : f32
    %80 = vector.broadcast %cst_49 : f32 to vector<4x1xf32>
    %81 = arith.addf %79, %80 : vector<4x1xf32>
    %82 = math.rsqrt %81 : vector<4x1xf32>
    %83 = vector.broadcast %82 : vector<4x1xf32> to vector<4x256xf32>
    %84 = arith.mulf %74, %83 : vector<4x256xf32>
    %85 = arith.addf %1, %84 : vector<4x256xf32>
    %cst_50 = arith.constant 0.000000e+00 : f32
    %86 = vector.broadcast %cst_50 : f32 to vector<4x256xf32>
    %87 = arith.maximumf %85, %86 : vector<4x256xf32>
    %c0_51 = arith.constant 0 : index
    %c0_52 = arith.constant 0 : index
    %c0_53 = arith.constant 0 : index
    %88 = vector.load %arg4[%c0_51, %c0_52, %c0_53] : memref<1x4x256xf32, #tpu.memory_space<vmem>>, vector<1x4x256xf32>
    %89 = vector.shape_cast %88 : vector<1x4x256xf32> to vector<4x256xf32>
    %90 = vector.shape_cast %87 : vector<4x256xf32> to vector<1x4x256xf32>
    tpu.vector_store %arg4[%c0_51, %c0_52, %c0_53], %90 {strides = array<i32>} : memref<1x4x256xf32, #tpu.memory_space<vmem>>, vector<1x4x256xf32>,
    return
  }
  func.func @transform_0(%arg0: i32) -> (i32, i32, i32) {
    %c0_i32 = arith.constant 0 : i32
    %c0_i32_0 = arith.constant 0 : i32
    %c0_i32_1 = arith.constant 0 : i32
    return %arg0, %c0_i32, %c0_i32_0 : i32, i32, i32
  }
  func.func @transform_1(%arg0: i32) -> (i32, i32, i32) {
    %c0_i32 = arith.constant 0 : i32
    %c0_i32_0 = arith.constant 0 : i32
    %c0_i32_1 = arith.constant 0 : i32
    %c0_i32_2 = arith.constant 0 : i32
    return %c0_i32, %c0_i32_0, %c0_i32_1 : i32, i32, i32
  }
  func.func @transform_2(%arg0: i32) -> (i32, i32) {
    %c0_i32 = arith.constant 0 : i32
    %c0_i32_0 = arith.constant 0 : i32
    %c0_i32_1 = arith.constant 0 : i32
    return %c0_i32, %c0_i32_0 : i32, i32
  }
  func.func @transform_3(%arg0: i32) -> (i32, i32, i32) {
    %c0_i32 = arith.constant 0 : i32
    %c0_i32_0 = arith.constant 0 : i32
    %c0_i32_1 = arith.constant 0 : i32
    return %arg0, %c0_i32, %c0_i32_0 : i32, i32, i32
  }
}

</mosaic_0001>

<llo_original>
// kernel: tpu_custom_call.1
$region0: #{tpu_custom_call.1}
  #allocation0 [shape = 'u32[]', space=smem, size = 0x4, offset = 0x4, fixed_abs, tag = 'smem constant byte address 0x4 - core index']
  #allocation1 [shape = 'u32[72,128]{1,0:T(1,128)}', space=vmem, size = 0x9000, scoped, tag = 'internal scratch']
  %s0 = inlined_call_operand.vmem [shape: f32[2,4,256], index: 0, kind: input, shape index: {}]
  %s1 = inlined_call_operand.vmem [shape: f32[9,4,4], index: 1, kind: input, shape index: {}]
  %s2 = inlined_call_operand.vmem [shape: f32[9,256], index: 2, kind: input, shape index: {}]
  %s3 = inlined_call_operand.hbm [shape: f32[2,4,256], index: 3, kind: output, shape index: {}]
  %s4 = sld [smem:[#allocation0]]
  $region45: #{tpu_custom_call.1} parent=0
    _
  %s6 = ssub.s32 1, %s4
  %s7 = scalar_select 0, %s6, %s4
  $region1: #{tpu_custom_call.1} parent=0
    #allocation2 [shape = 'u8[8192]{0}', space=vmem, size = 0x2000, scoped, tag = 'output window, operand 0']
    #allocation3 [shape = 's32[2]{0}', space=sflag, size = 0x8, scoped, tag = 'scoped memory for tpu_custom_call.1']
    %8 = vsyncpa [#allocation3], 0
    %s9 = scalar_lea.sflag [#allocation3], 1
    %10 = vsyncpa %s9, 0
    loop: start=0, step=1, limit=4
    $region2: #{tpu_custom_call.1} parent=1 // loop_pre_header
      _
    $region3: #{tpu_custom_call.1} parent=1 // loop_header
      %s12 = sphi 0, %s16
      %p13 = scmp.ge.s32.totalorder %s12, 4
      %s22 = sphi 0, %s24
      %s25 = sphi 0, %s22
      %s26 = sphi 0, %s25
      %s42 = sphi 0, %s26
      %s46 = sphi 0, %s46
      %s48 = sphi 0, %s46
      %s49 = sphi 0, %s48
      %s63 = sphi 0, %s49
      %s67 = sphi 0, %s67
      %s69 = sphi 0, %s67
      %s70 = sphi 0, %s69
      %s84 = sphi 0, %s70
      %s90 = sphi 0, %s92
      %s93 = sphi 0, %s90
      %s94 = sphi 0, %s93
      %s110 = sphi 0, %s94
    $region4: #{tpu_custom_call.1} parent=1 // loop_header_branch
      %15 = sbr.rel (%p13) target = $region8
    $region5: #{tpu_custom_call.1} parent=1 // loop_body
      %s17 = ssub.s32 %s12, 1
      %s18 = ssub.s32 %s12, 2
      %s19 = sadd.s32 %s12, 1
      %s20 = ssub.s32 %s12, %s19
      %p21 = scmp.eq.s32.totalorder %s20, 0
      %s23 = sadd.s32 %s22, 1
      %s24 = scalar_select %p21, %s22, %s23
      %p27 = pneg %p21
      %p28 = scmp.eq.s32.totalorder %s12, 1
      %p29 = por %p27, %p28
      %p30 = scmp.ne.s32.totalorder %s22, %s25
      %p31 = scmp.eq.s32.totalorder %s12, 0
      %p32 = por %p30, %p31
      %p33 = scmp.ne.s32.totalorder %s22, %s25
      %p34 = scmp.eq.s32.totalorder %s17, 1
      %p35 = por %p33, %p34
      %p36 = scmp.ne.s32.totalorder %s25, %s26
      %p37 = scmp.eq.s32.totalorder %s17, 0
      %p38 = por %p36, %p37
      %p39 = scmp.ne.s32.totalorder %s25, %s26
      %p40 = scmp.eq.s32.totalorder %s18, 1
      %p41 = por %p39, %p40
      %p43 = scmp.ne.s32.totalorder %s26, %s42
      %p44 = scmp.eq.s32.totalorder %s18, 0
      %p45 = por %p43, %p44
      %s47 = sadd.s32 %s46, 1
      %p50 = scmp.eq.s32.totalorder %s12, 1
      %p51 = scmp.ne.s32.totalorder %s46, %s48
      %p52 = scmp.eq.s32.totalorder %s12, 0
      %p53 = por %p51, %p52
      %p54 = scmp.ne.s32.totalorder %s46, %s48
      %p55 = scmp.eq.s32.totalorder %s17, 1
      %p56 = por %p54, %p55
      %p57 = scmp.ne.s32.totalorder %s48, %s49
      %p58 = scmp.eq.s32.totalorder %s17, 0
      %p59 = por %p57, %p58
      %p60 = scmp.ne.s32.totalorder %s48, %s49
      %p61 = scmp.eq.s32.totalorder %s18, 1
      %p62 = por %p60, %p61
      %p64 = scmp.ne.s32.totalorder %s49, %s63
      %p65 = scmp.eq.s32.totalorder %s18, 0
      %p66 = por %p64, %p65
      %s68 = sadd.s32 %s67, 1
      %p71 = scmp.eq.s32.totalorder %s12, 1
      %p72 = scmp.ne.s32.totalorder %s67, %s69
      %p73 = scmp.eq.s32.totalorder %s12, 0
      %p74 = por %p72, %p73
      %p75 = scmp.ne.s32.totalorder %s67, %s69
      %p76 = scmp.eq.s32.totalorder %s17, 1
      %p77 = por %p75, %p76
      %p78 = scmp.ne.s32.totalorder %s69, %s70
      %p79 = scmp.eq.s32.totalorder %s17, 0
      %p80 = por %p78, %p79
      %p81 = scmp.ne.s32.totalorder %s69, %s70
      %p82 = scmp.eq.s32.totalorder %s18, 1
      %p83 = por %p81, %p82
      %p85 = scmp.ne.s32.totalorder %s70, %s84
      %p86 = scmp.eq.s32.totalorder %s18, 0
      %p87 = por %p85, %p86
      %s88 = ssub.s32 %s12, %s19
      %p89 = scmp.eq.s32.totalorder %s88, 0
      %s91 = sadd.s32 %s90, 1
      %s92 = scalar_select %p89, %s90, %s91
      %p95 = pneg %p89
      %p96 = scmp.eq.s32.totalorder %s12, 1
      %p97 = por %p95, %p96
      %p98 = scmp.ne.s32.totalorder %s90, %s93
      %p99 = scmp.eq.s32.totalorder %s12, 0
      %p100 = por %p98, %p99
      %p101 = scmp.ne.s32.totalorder %s90, %s93
      %p102 = scmp.eq.s32.totalorder %s17, 1
      %p103 = por %p101, %p102
      %p104 = scmp.ne.s32.totalorder %s93, %s94
      %p105 = scmp.eq.s32.totalorder %s17, 0
      %p106 = por %p104, %p105
      %p107 = scmp.ne.s32.totalorder %s93, %s94
      %p108 = scmp.eq.s32.totalorder %s18, 1
      %p109 = por %p107, %p108
      %p111 = scmp.ne.s32.totalorder %s94, %s110
      %p112 = scmp.eq.s32.totalorder %s18, 0
      %p113 = por %p111, %p112
      %p114 = scmp.le.s32.totalorder 1, %s12
      %p115 = scmp.lt.s32.totalorder %s12, 3
      %p116 = pnand %p114, %p115
      %p117 = pneg %p116
      // Predicated region
      $region9: #{tpu_custom_call.1} parent=5 // pred_check
        _
      $region10: #{tpu_custom_call.1} parent=5 // pred_check_branch
        %119 = sbr.rel (%p116) target = $region12
      $region11: #{tpu_custom_call.1} parent=5 // pred_region
        %s120 = ssub.s32 %s12, 1
        // Predicated region
        $region13: #{tpu_custom_call.1} parent=11 // pred_check
          %p121 = pneg %p59
        $region14: #{tpu_custom_call.1} parent=11 // pred_check_branch
          %123 = sbr.rel (%p121) target = $region16
        $region15: #{tpu_custom_call.1} parent=11 // pred_region
          _
        $region16: #{tpu_custom_call.1} parent=11 // pred_fallthru
          _
        // Predicated region
        $region17: #{tpu_custom_call.1} parent=11 // pred_check
          %p124 = pneg %p80
        $region18: #{tpu_custom_call.1} parent=11 // pred_check_branch
          %126 = sbr.rel (%p124) target = $region20
        $region19: #{tpu_custom_call.1} parent=11 // pred_region
          _
        $region20: #{tpu_custom_call.1} parent=11 // pred_fallthru
          _
      $region12: #{tpu_custom_call.1} parent=5 // pred_fallthru
        _
      %p127 = scmp.lt.s32.totalorder %s12, 2
      // Predicated region
      $region21: #{tpu_custom_call.1} parent=5 // pred_check
        %p128 = pneg %p127
      $region22: #{tpu_custom_call.1} parent=5 // pred_check_branch
        %130 = sbr.rel (%p128) target = $region24
      $region23: #{tpu_custom_call.1} parent=5 // pred_region
        // Predicated region
        $region25: #{tpu_custom_call.1} parent=23 // pred_check
          %p131 = pneg %p32
        $region26: #{tpu_custom_call.1} parent=23 // pred_check_branch
          %133 = sbr.rel (%p131) target = $region28
        $region27: #{tpu_custom_call.1} parent=23 // pred_region
          %p134 = scmp.lt.s32.totalorder %s12, 1
          %s135 = scalar_select %p134, %s12, 1
          %s136 = smul.addr %s135, 2
          %s137 = smul.addr %s136, 4
          %s138 = scalar_lea.vmem %s0, %s137
        $region28: #{tpu_custom_call.1} parent=23 // pred_fallthru
          _
      $region24: #{tpu_custom_call.1} parent=5 // pred_fallthru
        _
      %p139 = scmp.le.s32.totalorder 1, %s12
      %p140 = scmp.lt.s32.totalorder %s12, 3
      %p141 = pnand %p139, %p140
      %p142 = pneg %p141
      // Predicated region
      $region29: #{tpu_custom_call.1} parent=5 // pred_check
        _
      $region30: #{tpu_custom_call.1} parent=5 // pred_check_branch
        %144 = sbr.rel (%p141) target = $region32
      $region31: #{tpu_custom_call.1} parent=5 // pred_region
        %s145 = ssub.s32 %s12, 1
        %p146 = scmp.lt.s32.totalorder %s17, 1
        %s147 = scalar_select %p146, %s17, 1
        %s148 = smul.addr %s147, 2
        %s149 = smul.addr %s148, 4
        %s150 = scalar_lea.vmem %s0, %s149
        %p151 = pneg %p38
        %p152 = pneg %p35
        %p153 = pneg %p59
        %p154 = pneg %p56
        %p155 = pneg %p80
        %p156 = pneg %p77
        %p157 = pneg %p106
        %p158 = pneg %p103
        %s159 = sand.u32 %s93, 1
        %s160 = scalar_lea.sflag [#allocation3], %s159
        %s161 = sand.u32 %s93, 1
        %s162 = smul.addr %s161, 8
        %s163 = scalar_lea.vmem [#allocation2], %s162
        %p164 = scmp.lt.s32.totalorder %s17, 1
        %s165 = scalar_select %p164, %s17, 1
        %s166 = smul.addr %s165, 2
        %s167 = smul.addr %s166, 4
        %s168 = scalar_lea.vmem %s0, %s167
        %v169 = vld [vmem:[%s168] sm:$0xff]
        %171 = vst [vmem:[#allocation1] ss:$2 sm:$0xff] %v169
        %v172 = vld.sshfl [vmem:[#allocation1] sm:$0xff pattern:$0x75316420]
        %v173 = vld.sshfl [vmem:[#allocation1 + $0x8] sm:$0xff pattern:$0x75316420]
        %176 = vrot.lane.b32.xlu0 %v172, 17
        %v177 = vpop.permute.xlu0 %176
        %178 = vrot.lane.b32.xlu0 %v173, 17
        %v179 = vpop.permute.xlu0 %178
        %v180 = vlaneseq
        %v181 = vand.u32 %v180, 127
        %vm182 = vcmp.lt.s32.totalorder %v181, 17
        %v183 = vsel %vm182, %v177, %v179
        %v184 = vsel %vm182, %v179, %v177
        %v185 = vld [vmem:[%s2] ss:$8 sm:$0x3]
        %v187 = vperm.slane %v185, 0
        %v188 = vperm.slane %v185, 1
        %v191 = vmul.f32 %v184, %v187
        %v192 = vmul.f32 %v183, %v188
        %v193 = vld [vmem:[%s1] sm:$0xf]
        %194 = vst [vmem:[#allocation1] ss:$2 sm:$0xff] %v169
        %v195 = vld.sshfl [vmem:[#allocation1] sm:$0xff pattern:$0x75316420]
        %v196 = vld.sshfl [vmem:[#allocation1 + $0x8] sm:$0xff pattern:$0x75316420]
        %199 = vrot.lane.b32.xlu0 %v195, 16
        %v200 = vpop.permute.xlu0 %199
        %201 = vrot.lane.b32.xlu0 %v196, 16
        %v202 = vpop.permute.xlu0 %201
        %vm203 = vcmp.lt.s32.totalorder %v181, 16
        %v204 = vsel %vm203, %v200, %v202
        %v205 = vsel %vm203, %v202, %v200
        %s206 = scalar_lea.vmem %s2, 1
        %v207 = vld [vmem:[%s206] ss:$8 sm:$0x3]
        %v209 = vperm.slane %v207, 0
        %v210 = vperm.slane %v207, 1
        %v213 = vmul.f32 %v205, %v209
        %v214 = vmul.f32 %v204, %v210
        %s215 = scalar_lea.vmem %s1, 4
        %v216 = vld [vmem:[%s215] sm:$0xf]
        %vm217 = vcmask 31744
        %v219 = vsel %vm217, %v216, 0
        %vm221 = vcmask 1043456
        %v223 = vsel %vm221, %v213, 0
        %v226 = vsel %vm221, %v214, 0
        %228 = vmatpush.msra.mxu0 0.0
        %229 = vmatpush.msra.mxu0 0.0
        %230 = vmatpush.msra.mxu0 0.0
        %231 = vmatpush.msra.mxu0 0.0
        %232 = vmatpush.msra.mxu0 0.0
        %233 = vmatpush.msra.mxu0 0.0
        %234 = vmatpush.msra.mxu0 0.0
        %235 = vmatpush.msra.mxu0 0.0
        %236 = vmatpush.msra.mxu0 0.0
        %237 = vmatpush.msra.mxu0 0.0
        %238 = vmatpush.msra.mxu0 0.0
        %239 = vmatpush.msra.mxu0 0.0
        %240 = vmatpush.msra.mxu0 0.0
        %241 = vmatpush.msra.mxu0 0.0
        %242 = vmatpush.msra.mxu0 0.0
        %243 = vmatpush.msra.mxu0 %v223
        %244 = vmatmul.f32.gmra.mxu0 %v219
        %v245 = vpop.f32.mrf.mxu0
        %v246 = vadd.f32 0.0, %v245
        %247 = vdwg.mxu0
        %248 = vmatpush.msra.mxu0 0.0
        %249 = vmatpush.msra.mxu0 0.0
        %250 = vmatpush.msra.mxu0 0.0
        %251 = vmatpush.msra.mxu0 0.0
        %252 = vmatpush.msra.mxu0 0.0
        %253 = vmatpush.msra.mxu0 0.0
        %254 = vmatpush.msra.mxu0 0.0
        %255 = vmatpush.msra.mxu0 0.0
        %256 = vmatpush.msra.mxu0 0.0
        %257 = vmatpush.msra.mxu0 0.0
        %258 = vmatpush.msra.mxu0 0.0
        %259 = vmatpush.msra.mxu0 0.0
        %260 = vmatpush.msra.mxu0 0.0
        %261 = vmatpush.msra.mxu0 0.0
        %262 = vmatpush.msra.mxu0 0.0
        %263 = vmatpush.msra.mxu0 %v226
        %264 = vmatmul.f32.gmra.mxu0 %v219
        %v265 = vpop.f32.mrf.mxu0
        %v266 = vadd.f32 0.0, %v265
        %267 = vdwg.mxu0
        %v269 = vsel %vm217, %v193, 0
        %v272 = vsel %vm221, %v191, 0
        %v275 = vsel %vm221, %v192, 0
        %277 = vmatpush.msra.mxu0 0.0
        %278 = vmatpush.msra.mxu0 0.0
        %279 = vmatpush.msra.mxu0 0.0
        %280 = vmatpush.msra.mxu0 0.0
        %281 = vmatpush.msra.mxu0 0.0
        %282 = vmatpush.msra.mxu0 0.0
        %283 = vmatpush.msra.mxu0 0.0
        %284 = vmatpush.msra.mxu0 0.0
        %285 = vmatpush.msra.mxu0 0.0
        %286 = vmatpush.msra.mxu0 0.0
        %287 = vmatpush.msra.mxu0 0.0
        %288 = vmatpush.msra.mxu0 0.0
        %289 = vmatpush.msra.mxu0 0.0
        %290 = vmatpush.msra.mxu0 0.0
        %291 = vmatpush.msra.mxu0 0.0
        %292 = vmatpush.msra.mxu0 %v272
        %293 = vmatmul.f32.gmra.mxu0 %v269
        %v294 = vpop.f32.mrf.mxu0
        %v295 = vadd.f32 %v246, %v294
        %296 = vdwg.mxu0
        %297 = vmatpush.msra.mxu0 0.0
        %298 = vmatpush.msra.mxu0 0.0
        %299 = vmatpush.msra.mxu0 0.0
        %300 = vmatpush.msra.mxu0 0.0
        %301 = vmatpush.msra.mxu0 0.0
        %302 = vmatpush.msra.mxu0 0.0
        %303 = vmatpush.msra.mxu0 0.0
        %304 = vmatpush.msra.mxu0 0.0
        %305 = vmatpush.msra.mxu0 0.0
        %306 = vmatpush.msra.mxu0 0.0
        %307 = vmatpush.msra.mxu0 0.0
        %308 = vmatpush.msra.mxu0 0.0
        %309 = vmatpush.msra.mxu0 0.0
        %310 = vmatpush.msra.mxu0 0.0
        %311 = vmatpush.msra.mxu0 0.0
        %312 = vmatpush.msra.mxu0 %v275
        %313 = vmatmul.f32.gmra.mxu0 %v269
        %v314 = vpop.f32.mrf.mxu0
        %v315 = vadd.f32 %v266, %v314
        %316 = vdwg.mxu0
        %317 = vst [vmem:[#allocation1] ss:$2 sm:$0xff] %v169
        %v318 = vld.sshfl [vmem:[#allocation1] sm:$0xff pattern:$0x75316420]
        %v319 = vld.sshfl [vmem:[#allocation1 + $0x8] sm:$0xff pattern:$0x75316420]
        %322 = vrot.lane.b32.xlu0 %v318, 15
        %v323 = vpop.permute.xlu0 %322
        %324 = vrot.lane.b32.xlu0 %v319, 15
        %v325 = vpop.permute.xlu0 %324
        %vm326 = vcmp.lt.s32.totalorder %v181, 15
        %v327 = vsel %vm326, %v323, %v325
        %v328 = vsel %vm326, %v325, %v323
        %s329 = scalar_lea.vmem %s2, 2
        %v330 = vld [vmem:[%s329] ss:$8 sm:$0x3]
        %v332 = vperm.slane %v330, 0
        %v333 = vperm.slane %v330, 1
        %v336 = vmul.f32 %v328, %v332
        %v337 = vmul.f32 %v327, %v333
        %s338 = scalar_lea.vmem %s1, 8
        %v339 = vld [vmem:[%s338] sm:$0xf]
        %v341 = vsel %vm217, %v339, 0
        %v344 = vsel %vm221, %v336, 0
        %v347 = vsel %vm221, %v337, 0
        %349 = vmatpush.msra.mxu0 0.0
        %350 = vmatpush.msra.mxu0 0.0
        %351 = vmatpush.msra.mxu0 0.0
        %352 = vmatpush.msra.mxu0 0.0
        %353 = vmatpush.msra.mxu0 0.0
        %354 = vmatpush.msra.mxu0 0.0
        %355 = vmatpush.msra.mxu0 0.0
        %356 = vmatpush.msra.mxu0 0.0
        %357 = vmatpush.msra.mxu0 0.0
        %358 = vmatpush.msra.mxu0 0.0
        %359 = vmatpush.msra.mxu0 0.0
        %360 = vmatpush.msra.mxu0 0.0
        %361 = vmatpush.msra.mxu0 0.0
        %362 = vmatpush.msra.mxu0 0.0
        %363 = vmatpush.msra.mxu0 0.0
        %364 = vmatpush.msra.mxu0 %v344
        %365 = vmatmul.f32.gmra.mxu0 %v341
        %v366 = vpop.f32.mrf.mxu0
        %v367 = vadd.f32 0.0, %v366
        %368 = vdwg.mxu0
        %369 = vmatpush.msra.mxu0 0.0
        %370 = vmatpush.msra.mxu0 0.0
        %371 = vmatpush.msra.mxu0 0.0
        %372 = vmatpush.msra.mxu0 0.0
        %373 = vmatpush.msra.mxu0 0.0
        %374 = vmatpush.msra.mxu0 0.0
        %375 = vmatpush.msra.mxu0 0.0
        %376 = vmatpush.msra.mxu0 0.0
        %377 = vmatpush.msra.mxu0 0.0
        %378 = vmatpush.msra.mxu0 0.0
        %379 = vmatpush.msra.mxu0 0.0
        %380 = vmatpush.msra.mxu0 0.0
        %381 = vmatpush.msra.mxu0 0.0
        %382 = vmatpush.msra.mxu0 0.0
        %383 = vmatpush.msra.mxu0 0.0
        %384 = vmatpush.msra.mxu0 %v347
        %385 = vmatmul.f32.gmra.mxu0 %v341
        %v386 = vpop.f32.mrf.mxu0
        %v387 = vadd.f32 0.0, %v386
        %388 = vdwg.mxu0
        %v389 = vadd.f32 %v295, %v367
        %v390 = vadd.f32 %v315, %v387
        %391 = vst [vmem:[#allocation1] ss:$2 sm:$0xff] %v169
        %v392 = vld.sshfl [vmem:[#allocation1] sm:$0xff pattern:$0x75316420]
        %v393 = vld.sshfl [vmem:[#allocation1 + $0x8] sm:$0xff pattern:$0x75316420]
        %396 = vrot.lane.b32.xlu0 %v392, 1
        %v397 = vpop.permute.xlu0 %396
        %398 = vrot.lane.b32.xlu0 %v393, 1
        %v399 = vpop.permute.xlu0 %398
        %vm400 = vcmp.lt.s32.totalorder %v181, 1
        %v401 = vsel %vm400, %v397, %v399
        %v402 = vsel %vm400, %v399, %v397
        %s403 = scalar_lea.vmem %s2, 3
        %v404 = vld [vmem:[%s403] ss:$8 sm:$0x3]
        %v406 = vperm.slane %v404, 0
        %v407 = vperm.slane %v404, 1
        %v410 = vmul.f32 %v402, %v406
        %v411 = vmul.f32 %v401, %v407
        %s412 = scalar_lea.vmem %s1, 12
        %v413 = vld [vmem:[%s412] sm:$0xf]
        %v415 = vsel %vm217, %v413, 0
        %v418 = vsel %vm221, %v410, 0
        %v421 = vsel %vm221, %v411, 0
        %423 = vmatpush.msra.mxu0 0.0
        %424 = vmatpush.msra.mxu0 0.0
        %425 = vmatpush.msra.mxu0 0.0
        %426 = vmatpush.msra.mxu0 0.0
        %427 = vmatpush.msra.mxu0 0.0
        %428 = vmatpush.msra.mxu0 0.0
        %429 = vmatpush.msra.mxu0 0.0
        %430 = vmatpush.msra.mxu0 0.0
        %431 = vmatpush.msra.mxu0 0.0
        %432 = vmatpush.msra.mxu0 0.0
        %433 = vmatpush.msra.mxu0 0.0
        %434 = vmatpush.msra.mxu0 0.0
        %435 = vmatpush.msra.mxu0 0.0
        %436 = vmatpush.msra.mxu0 0.0
        %437 = vmatpush.msra.mxu0 0.0
        %438 = vmatpush.msra.mxu0 %v418
        %439 = vmatmul.f32.gmra.mxu0 %v415
        %v440 = vpop.f32.mrf.mxu0
        %v441 = vadd.f32 0.0, %v440
        %442 = vdwg.mxu0
        %443 = vmatpush.msra.mxu0 0.0
        %444 = vmatpush.msra.mxu0 0.0
        %445 = vmatpush.msra.mxu0 0.0
        %446 = vmatpush.msra.mxu0 0.0
        %447 = vmatpush.msra.mxu0 0.0
        %448 = vmatpush.msra.mxu0 0.0
        %449 = vmatpush.msra.mxu0 0.0
        %450 = vmatpush.msra.mxu0 0.0
        %451 = vmatpush.msra.mxu0 0.0
        %452 = vmatpush.msra.mxu0 0.0
        %453 = vmatpush.msra.mxu0 0.0
        %454 = vmatpush.msra.mxu0 0.0
        %455 = vmatpush.msra.mxu0 0.0
        %456 = vmatpush.msra.mxu0 0.0
        %457 = vmatpush.msra.mxu0 0.0
        %458 = vmatpush.msra.mxu0 %v421
        %459 = vmatmul.f32.gmra.mxu0 %v415
        %v460 = vpop.f32.mrf.mxu0
        %v461 = vadd.f32 0.0, %v460
        %462 = vdwg.mxu0
        %v463 = vadd.f32 %v389, %v441
        %v464 = vadd.f32 %v390, %v461
        %s465 = scalar_lea.vmem %s1, 16
        %v466 = vld [vmem:[%s465] sm:$0xf]
        %467 = vst [vmem:[#allocation1] ss:$2 sm:$0xff] %v169
        %v468 = vld.sshfl [vmem:[#allocation1] sm:$0xff pattern:$0x75316420]
        %v469 = vld.sshfl [vmem:[#allocation1 + $0x8] sm:$0xff pattern:$0x75316420]
        %v471 = vsel %vm217, %v466, 0
        %v473 = vsel %vm221, %v468, 0
        %v475 = vsel %vm221, %v469, 0
        %477 = vmatpush.msra.mxu0 0.0
        %478 = vmatpush.msra.mxu0 0.0
        %479 = vmatpush.msra.mxu0 0.0
        %480 = vmatpush.msra.mxu0 0.0
        %481 = vmatpush.msra.mxu0 0.0
        %482 = vmatpush.msra.mxu0 0.0
        %483 = vmatpush.msra.mxu0 0.0
        %484 = vmatpush.msra.mxu0 0.0
        %485 = vmatpush.msra.mxu0 0.0
        %486 = vmatpush.msra.mxu0 0.0
        %487 = vmatpush.msra.mxu0 0.0
        %488 = vmatpush.msra.mxu0 0.0
        %489 = vmatpush.msra.mxu0 0.0
        %490 = vmatpush.msra.mxu0 0.0
        %491 = vmatpush.msra.mxu0 0.0
        %492 = vmatpush.msra.mxu0 %v473
        %493 = vmatmul.f32.gmra.mxu0 %v471
        %v494 = vpop.f32.mrf.mxu0
        %v495 = vadd.f32 0.0, %v494
        %496 = vdwg.mxu0
        %497 = vmatpush.msra.mxu0 0.0
        %498 = vmatpush.msra.mxu0 0.0
        %499 = vmatpush.msra.mxu0 0.0
        %500 = vmatpush.msra.mxu0 0.0
        %501 = vmatpush.msra.mxu0 0.0
        %502 = vmatpush.msra.mxu0 0.0
        %503 = vmatpush.msra.mxu0 0.0
        %504 = vmatpush.msra.mxu0 0.0
        %505 = vmatpush.msra.mxu0 0.0
        %506 = vmatpush.msra.mxu0 0.0
        %507 = vmatpush.msra.mxu0 0.0
        %508 = vmatpush.msra.mxu0 0.0
        %509 = vmatpush.msra.mxu0 0.0
        %510 = vmatpush.msra.mxu0 0.0
        %511 = vmatpush.msra.mxu0 0.0
        %512 = vmatpush.msra.mxu0 %v475
        %513 = vmatmul.f32.gmra.mxu0 %v471
        %v514 = vpop.f32.mrf.mxu0
        %v515 = vadd.f32 0.0, %v514
        %516 = vdwg.mxu0
        %v517 = vadd.f32 %v463, %v495
        %v518 = vadd.f32 %v464, %v515
        %519 = vst [vmem:[#allocation1] ss:$2 sm:$0xff] %v169
        %v520 = vld.sshfl [vmem:[#allocation1] sm:$0xff pattern:$0x75316420]
        %v521 = vld.sshfl [vmem:[#allocation1 + $0x8] sm:$0xff pattern:$0x75316420]
        %524 = vrot.lane.b32.xlu0 %v520, 127
        %v525 = vpop.permute.xlu0 %524
        %526 = vrot.lane.b32.xlu0 %v521, 127
        %v527 = vpop.permute.xlu0 %526
        %vm528 = vcmp.lt.s32.totalorder %v181, 127
        %v529 = vsel %vm528, %v525, %v527
        %v530 = vsel %vm528, %v527, %v525
        %s531 = scalar_lea.vmem %s2, 5
        %v532 = vld [vmem:[%s531] ss:$8 sm:$0x3]
        %v534 = vperm.slane %v532, 0
        %v535 = vperm.slane %v532, 1
        %v538 = vmul.f32 %v529, %v534
        %v539 = vmul.f32 %v530, %v535
        %s540 = scalar_lea.vmem %s1, 20
        %v541 = vld [vmem:[%s540] sm:$0xf]
        %v543 = vsel %vm217, %v541, 0
        %v546 = vsel %vm221, %v538, 0
        %v549 = vsel %vm221, %v539, 0
        %551 = vmatpush.msra.mxu0 0.0
        %552 = vmatpush.msra.mxu0 0.0
        %553 = vmatpush.msra.mxu0 0.0
        %554 = vmatpush.msra.mxu0 0.0
        %555 = vmatpush.msra.mxu0 0.0
        %556 = vmatpush.msra.mxu0 0.0
        %557 = vmatpush.msra.mxu0 0.0
        %558 = vmatpush.msra.mxu0 0.0
        %559 = vmatpush.msra.mxu0 0.0
        %560 = vmatpush.msra.mxu0 0.0
        %561 = vmatpush.msra.mxu0 0.0
        %562 = vmatpush.msra.mxu0 0.0
        %563 = vmatpush.msra.mxu0 0.0
        %564 = vmatpush.msra.mxu0 0.0
        %565 = vmatpush.msra.mxu0 0.0
        %566 = vmatpush.msra.mxu0 %v546
        %567 = vmatmul.f32.gmra.mxu0 %v543
        %v568 = vpop.f32.mrf.mxu0
        %v569 = vadd.f32 0.0, %v568
        %570 = vdwg.mxu0
        %571 = vmatpush.msra.mxu0 0.0
        %572 = vmatpush.msra.mxu0 0.0
        %573 = vmatpush.msra.mxu0 0.0
        %574 = vmatpush.msra.mxu0 0.0
        %575 = vmatpush.msra.mxu0 0.0
        %576 = vmatpush.msra.mxu0 0.0
        %577 = vmatpush.msra.mxu0 0.0
        %578 = vmatpush.msra.mxu0 0.0
        %579 = vmatpush.msra.mxu0 0.0
        %580 = vmatpush.msra.mxu0 0.0
        %581 = vmatpush.msra.mxu0 0.0
        %582 = vmatpush.msra.mxu0 0.0
        %583 = vmatpush.msra.mxu0 0.0
        %584 = vmatpush.msra.mxu0 0.0
        %585 = vmatpush.msra.mxu0 0.0
        %586 = vmatpush.msra.mxu0 %v549
        %587 = vmatmul.f32.gmra.mxu0 %v543
        %v588 = vpop.f32.mrf.mxu0
        %v589 = vadd.f32 0.0, %v588
        %590 = vdwg.mxu0
        %v591 = vadd.f32 %v517, %v569
        %v592 = vadd.f32 %v518, %v589
        %593 = vst [vmem:[#allocation1] ss:$2 sm:$0xff] %v169
        %v594 = vld.sshfl [vmem:[#allocation1] sm:$0xff pattern:$0x75316420]
        %v595 = vld.sshfl [vmem:[#allocation1 + $0x8] sm:$0xff pattern:$0x75316420]
        %598 = vrot.lane.b32.xlu0 %v594, 113
        %v599 = vpop.permute.xlu0 %598
        %600 = vrot.lane.b32.xlu0 %v595, 113
        %v601 = vpop.permute.xlu0 %600
        %vm602 = vcmp.lt.s32.totalorder %v181, 113
        %v603 = vsel %vm602, %v599, %v601
        %v604 = vsel %vm602, %v601, %v599
        %s605 = scalar_lea.vmem %s2, 6
        %v606 = vld [vmem:[%s605] ss:$8 sm:$0x3]
        %v608 = vperm.slane %v606, 0
        %v609 = vperm.slane %v606, 1
        %v612 = vmul.f32 %v603, %v608
        %v613 = vmul.f32 %v604, %v609
        %s614 = scalar_lea.vmem %s1, 24
        %v615 = vld [vmem:[%s614] sm:$0xf]
        %v617 = vsel %vm217, %v615, 0
        %v620 = vsel %vm221, %v612, 0
        %v623 = vsel %vm221, %v613, 0
        %625 = vmatpush.msra.mxu0 0.0
        %626 = vmatpush.msra.mxu0 0.0
        %627 = vmatpush.msra.mxu0 0.0
        %628 = vmatpush.msra.mxu0 0.0
        %629 = vmatpush.msra.mxu0 0.0
        %630 = vmatpush.msra.mxu0 0.0
        %631 = vmatpush.msra.mxu0 0.0
        %632 = vmatpush.msra.mxu0 0.0
        %633 = vmatpush.msra.mxu0 0.0
        %634 = vmatpush.msra.mxu0 0.0
        %635 = vmatpush.msra.mxu0 0.0
        %636 = vmatpush.msra.mxu0 0.0
        %637 = vmatpush.msra.mxu0 0.0
        %638 = vmatpush.msra.mxu0 0.0
        %639 = vmatpush.msra.mxu0 0.0
        %640 = vmatpush.msra.mxu0 %v620
        %641 = vmatmul.f32.gmra.mxu0 %v617
        %v642 = vpop.f32.mrf.mxu0
        %v643 = vadd.f32 0.0, %v642
        %644 = vdwg.mxu0
        %645 = vmatpush.msra.mxu0 0.0
        %646 = vmatpush.msra.mxu0 0.0
        %647 = vmatpush.msra.mxu0 0.0
        %648 = vmatpush.msra.mxu0 0.0
        %649 = vmatpush.msra.mxu0 0.0
        %650 = vmatpush.msra.mxu0 0.0
        %651 = vmatpush.msra.mxu0 0.0
        %652 = vmatpush.msra.mxu0 0.0
        %653 = vmatpush.msra.mxu0 0.0
        %654 = vmatpush.msra.mxu0 0.0
        %655 = vmatpush.msra.mxu0 0.0
        %656 = vmatpush.msra.mxu0 0.0
        %657 = vmatpush.msra.mxu0 0.0
        %658 = vmatpush.msra.mxu0 0.0
        %659 = vmatpush.msra.mxu0 0.0
        %660 = vmatpush.msra.mxu0 %v623
        %661 = vmatmul.f32.gmra.mxu0 %v617
        %v662 = vpop.f32.mrf.mxu0
        %v663 = vadd.f32 0.0, %v662
        %664 = vdwg.mxu0
        %v665 = vadd.f32 %v591, %v643
        %v666 = vadd.f32 %v592, %v663
        %667 = vst [vmem:[#allocation1] ss:$2 sm:$0xff] %v169
        %v668 = vld.sshfl [vmem:[#allocation1] sm:$0xff pattern:$0x75316420]
        %v669 = vld.sshfl [vmem:[#allocation1 + $0x8] sm:$0xff pattern:$0x75316420]
        %672 = vrot.lane.b32.xlu0 %v668, 112
        %v673 = vpop.permute.xlu0 %672
        %674 = vrot.lane.b32.xlu0 %v669, 112
        %v675 = vpop.permute.xlu0 %674
        %vm676 = vcmp.lt.s32.totalorder %v181, 112
        %v677 = vsel %vm676, %v673, %v675
        %v678 = vsel %vm676, %v675, %v673
        %s679 = scalar_lea.vmem %s2, 7
        %v680 = vld [vmem:[%s679] ss:$8 sm:$0x3]
        %v682 = vperm.slane %v680, 0
        %v683 = vperm.slane %v680, 1
        %v686 = vmul.f32 %v677, %v682
        %v687 = vmul.f32 %v678, %v683
        %s688 = scalar_lea.vmem %s1, 28
        %v689 = vld [vmem:[%s688] sm:$0xf]
        %v691 = vsel %vm217, %v689, 0
        %v694 = vsel %vm221, %v686, 0
        %v697 = vsel %vm221, %v687, 0
        %699 = vmatpush.msra.mxu0 0.0
        %700 = vmatpush.msra.mxu0 0.0
        %701 = vmatpush.msra.mxu0 0.0
        %702 = vmatpush.msra.mxu0 0.0
        %703 = vmatpush.msra.mxu0 0.0
        %704 = vmatpush.msra.mxu0 0.0
        %705 = vmatpush.msra.mxu0 0.0
        %706 = vmatpush.msra.mxu0 0.0
        %707 = vmatpush.msra.mxu0 0.0
        %708 = vmatpush.msra.mxu0 0.0
        %709 = vmatpush.msra.mxu0 0.0
        %710 = vmatpush.msra.mxu0 0.0
        %711 = vmatpush.msra.mxu0 0.0
        %712 = vmatpush.msra.mxu0 0.0
        %713 = vmatpush.msra.mxu0 0.0
        %714 = vmatpush.msra.mxu0 %v694
        %715 = vmatmul.f32.gmra.mxu0 %v691
        %v716 = vpop.f32.mrf.mxu0
        %v717 = vadd.f32 0.0, %v716
        %718 = vdwg.mxu0
        %719 = vmatpush.msra.mxu0 0.0
        %720 = vmatpush.msra.mxu0 0.0
        %721 = vmatpush.msra.mxu0 0.0
        %722 = vmatpush.msra.mxu0 0.0
        %723 = vmatpush.msra.mxu0 0.0
        %724 = vmatpush.msra.mxu0 0.0
        %725 = vmatpush.msra.mxu0 0.0
        %726 = vmatpush.msra.mxu0 0.0
        %727 = vmatpush.msra.mxu0 0.0
        %728 = vmatpush.msra.mxu0 0.0
        %729 = vmatpush.msra.mxu0 0.0
        %730 = vmatpush.msra.mxu0 0.0
        %731 = vmatpush.msra.mxu0 0.0
        %732 = vmatpush.msra.mxu0 0.0
        %733 = vmatpush.msra.mxu0 0.0
        %734 = vmatpush.msra.mxu0 %v697
        %735 = vmatmul.f32.gmra.mxu0 %v691
        %v736 = vpop.f32.mrf.mxu0
        %v737 = vadd.f32 0.0, %v736
        %738 = vdwg.mxu0
        %v739 = vadd.f32 %v665, %v717
        %v740 = vadd.f32 %v666, %v737
        %741 = vst [vmem:[#allocation1] ss:$2 sm:$0xff] %v169
        %v742 = vld.sshfl [vmem:[#allocation1] sm:$0xff pattern:$0x75316420]
        %v743 = vld.sshfl [vmem:[#allocation1 + $0x8] sm:$0xff pattern:$0x75316420]
        %746 = vrot.lane.b32.xlu0 %v742, 111
        %v747 = vpop.permute.xlu0 %746
        %748 = vrot.lane.b32.xlu0 %v743, 111
        %v749 = vpop.permute.xlu0 %748
        %vm750 = vcmp.lt.s32.totalorder %v181, 111
        %v751 = vsel %vm750, %v747, %v749
        %v752 = vsel %vm750, %v749, %v747
        %s753 = scalar_lea.vmem %s2, 16
        %v754 = vld [vmem:[%s753] ss:$8 sm:$0x3]
        %v756 = vperm.slane %v754, 0
        %v757 = vperm.slane %v754, 1
        %v760 = vmul.f32 %v751, %v756
        %v761 = vmul.f32 %v752, %v757
        %s762 = scalar_lea.vmem %s1, 32
        %v763 = vld [vmem:[%s762] sm:$0xf]
        %v765 = vsel %vm217, %v763, 0
        %v768 = vsel %vm221, %v760, 0
        %v771 = vsel %vm221, %v761, 0
        %773 = vmatpush.msra.mxu0 0.0
        %774 = vmatpush.msra.mxu0 0.0
        %775 = vmatpush.msra.mxu0 0.0
        %776 = vmatpush.msra.mxu0 0.0
        %777 = vmatpush.msra.mxu0 0.0
        %778 = vmatpush.msra.mxu0 0.0
        %779 = vmatpush.msra.mxu0 0.0
        %780 = vmatpush.msra.mxu0 0.0
        %781 = vmatpush.msra.mxu0 0.0
        %782 = vmatpush.msra.mxu0 0.0
        %783 = vmatpush.msra.mxu0 0.0
        %784 = vmatpush.msra.mxu0 0.0
        %785 = vmatpush.msra.mxu0 0.0
        %786 = vmatpush.msra.mxu0 0.0
        %787 = vmatpush.msra.mxu0 0.0
        %788 = vmatpush.msra.mxu0 %v768
        %789 = vmatmul.f32.gmra.mxu0 %v765
        %v790 = vpop.f32.mrf.mxu0
        %v791 = vadd.f32 0.0, %v790
        %792 = vdwg.mxu0
        %793 = vmatpush.msra.mxu0 0.0
        %794 = vmatpush.msra.mxu0 0.0
        %795 = vmatpush.msra.mxu0 0.0
        %796 = vmatpush.msra.mxu0 0.0
        %797 = vmatpush.msra.mxu0 0.0
        %798 = vmatpush.msra.mxu0 0.0
        %799 = vmatpush.msra.mxu0 0.0
        %800 = vmatpush.msra.mxu0 0.0
        %801 = vmatpush.msra.mxu0 0.0
        %802 = vmatpush.msra.mxu0 0.0
        %803 = vmatpush.msra.mxu0 0.0
        %804 = vmatpush.msra.mxu0 0.0
        %805 = vmatpush.msra.mxu0 0.0
        %806 = vmatpush.msra.mxu0 0.0
        %807 = vmatpush.msra.mxu0 0.0
        %808 = vmatpush.msra.mxu0 %v771
        %809 = vmatmul.f32.gmra.mxu0 %v765
        %v810 = vpop.f32.mrf.mxu0
        %v811 = vadd.f32 0.0, %v810
        %812 = vdwg.mxu0
        %v813 = vadd.f32 %v739, %v791
        %v814 = vadd.f32 %v740, %v811
        %v815 = vsel %vm221, %v813, 0.0
        %v816 = vsel %vm221, %v814, 0.0
        %v817 = vadd.f32 %v815, %v816
        %818 = vadd.xlane.f32.xlu0 %v817
        %v819 = vpop.xlane.xlu0 %818
        %v820 = vmul.f32 %v819, 0.00390625
        %v821 = vsub.f32 %v813, %v820
        %v822 = vsub.f32 %v814, %v820
        %v823 = vmul.f32 %v821, %v821
        %v824 = vmul.f32 %v822, %v822
        %v825 = vsel %vm221, %v823, 0.0
        %v826 = vsel %vm221, %v824, 0.0
        %v827 = vadd.f32 %v825, %v826
        %828 = vadd.xlane.f32.xlu0 %v827
        %v829 = vpop.xlane.xlu0 %828
        %v830 = vmul.f32 %v829, 0.00390625
        %v831 = vadd.f32 %v830, 1e-05
        %v832 = vrsqrt.pop %v831
        %v833 = vmul.f32 %v832, %v831
        %v834 = vmul.f32 %v833, %v832
        %v835 = vmul.f32 0.5, %v834
        %v836 = vsub.f32 1.5, %v835
        %v837 = vmul.f32 %v832, %v836
        %vm838 = vweird.f32 %v831
        %vm839 = vweird.f32 %v832
        %vm840 = vmor %vm838, %vm839
        %v841 = vsel %vm840, %v832, %v837
        %v842 = vmul.f32 %v821, %v841
        %v843 = vmul.f32 %v822, %v841
        %v846 = vrot.slane %v843, 4
        %v847 = vsel %vm221, %v842, %v846
        %v849 = vadd.f32 %v169, %v847
        %v850 = vmax.f32 %v849, 0.0
        %851 = vst [vmem:[%s163] sm:$0xff] %v850
        %s852 = sand.u32 %s93, 1
        %s853 = scalar_lea.sflag [#allocation3], %s852
        %s854 = sand.u32 %s93, 1
        %s855 = smul.addr %s854, 8
        %s856 = scalar_lea.vmem [#allocation2], %s855
        // Predicated region
        $region33: #{tpu_custom_call.1} parent=31 // pred_check
          %p857 = pneg %p103
        $region34: #{tpu_custom_call.1} parent=31 // pred_check_branch
          %859 = sbr.rel (%p857) target = $region36
        $region35: #{tpu_custom_call.1} parent=31 // pred_region
          %861 = vsyncadd %s853, 0
          %s862 = smul.addr %s17, 2
          %s863 = smul.addr %s862, 4
          %s864 = scalar_lea.hbm %s3, %s863
          %s866 = sshll.u32 %s856, 4
          %s867 = int_to_ptr.vmem [resolvable:$true] %s866
          %s868 = sshll.u32 %s864, 4
          %s869 = int_to_ptr.hbm [resolvable:$true] %s868
          %871 = dma.vmem_to_hbm [thread:$0]  %s867, 128, %s869, %s853
        $region36: #{tpu_custom_call.1} parent=31 // pred_fallthru
          _
      $region32: #{tpu_custom_call.1} parent=5 // pred_fallthru
        _
      %p872 = scmp.le.s32.totalorder 2, %s12
      // Predicated region
      $region37: #{tpu_custom_call.1} parent=5 // pred_check
        %p873 = pneg %p872
      $region38: #{tpu_custom_call.1} parent=5 // pred_check_branch
        %875 = sbr.rel (%p873) target = $region40
      $region39: #{tpu_custom_call.1} parent=5 // pred_region
        %s876 = ssub.s32 %s12, 2
        // Predicated region
        $region41: #{tpu_custom_call.1} parent=39 // pred_check
          %p877 = pneg %p109
        $region42: #{tpu_custom_call.1} parent=39 // pred_check_branch
          %879 = sbr.rel (%p877) target = $region44
        $region43: #{tpu_custom_call.1} parent=39 // pred_region
          %s880 = sand.u32 %s94, 1
          %s881 = scalar_lea.sflag [#allocation3], %s880
          %s882 = sand.u32 %s94, 1
          %s883 = smul.addr %s882, 8
          %s884 = scalar_lea.vmem [#allocation2], %s883
          %886 = dma.done %s881, 128
        $region44: #{tpu_custom_call.1} parent=39 // pred_fallthru
          _
      $region40: #{tpu_custom_call.1} parent=5 // pred_fallthru
        _
    $region6: #{tpu_custom_call.1} parent=1 // loop_footer
      %s16 = sadd.s32 1, %s12
    $region7: #{tpu_custom_call.1} parent=1 // loop_footer_branch
      %11 = sbr.rel target = $region3
    $region8: #{tpu_custom_call.1} parent=1 // loop_exit
      _
    %887 = vsyncpa [#allocation3], 1
    %s888 = scalar_lea.sflag [#allocation3], 1
    %889 = vsyncpa %s888, 1

</llo_original>
